<compile_context>
chip_gen: v7x
topology: tpu7x:2x2x1
jax: 0.10.0
libtpu: 0.0.40
codegen_flags: <defaults>
</compile_context>

<pallas_src>
import math
from functools import partial

import jax
import jax.numpy as jnp
from jax import lax
from jax.experimental import pallas as pl
from jax.experimental.pallas import tpu as pltpu

_NEG_BIG = -1e30  # finite "-inf" for masked KV columns (avoids inf-inf NaNs)


# ---------------------------------------------------------------------------
# small helpers
# ---------------------------------------------------------------------------
def _round_up(x, m):
    return ((x + m - 1) // m) * m


def _vmem_budget():
    """Generation-aware usable VMEM (v5e/v6e: ~109 MiB, v7x: ~54 MiB)."""
    try:
        cap = int(pltpu.get_tpu_info().vmem_capacity_bytes)
    except Exception:
        cap = 64 * 1024 * 1024          # conservative (v7x) fallback
    return max(32 * 1024 * 1024, int(cap * 0.85))


def _pick_dim(dim, cap, quant):
    """(tile, padded_dim): full extent if it fits, else a quant-aligned
    divisor, else pad up to a multiple of `cap`."""
    if dim <= cap:
        return dim, dim
    t = (cap // quant) * quant
    floor = max(quant, cap // 4)
    while t >= floor:
        if dim % t == 0:
            return t, dim
        t -= quant
    return cap, _round_up(dim, cap)


def _seq_tile(length, cap):
    if length <= cap:
        return length, length           # full-extent block, no padding
    return cap, _round_up(length, cap)


def _shrink_attn_caps(E, isz, lt_max, st_max, budget):
    def est(lt, st):
        return (4 * lt * E * isz + 4 * st * E * isz   # q/out + k/v (2-buffered)
                + lt * E * 4                          # f32 accumulator
                + 2 * lt * st * 4)                    # live score tiles
    while st_max > 128 and est(lt_max, st_max) > budget:
        st_max //= 2
    while lt_max > 128 and est(lt_max, st_max) > budget:
        lt_max //= 2
    return min(lt_max, st_max), st_max


# ---------------------------------------------------------------------------
# fused linear:  y[p] = x @ w_t[p] + bias[p]   (LoRA already folded into w_t)
#   All P projections are computed inside one grid step, so with full-extent
#   K/N tiles the activation AND the weights are each DMA'd from HBM once.
# ---------------------------------------------------------------------------
def _linear_kernel(x_ref, w_ref, b_ref, o_ref, acc_ref):
    kk = pl.program_id(2)
    n_proj = o_ref.shape[0]

    @pl.when(kk == 0)
    def _():
        acc_ref[...] = jnp.zeros(acc_ref.shape, acc_ref.dtype)

    x = x_ref[...]                                        # read x tile once
    for p in range(n_proj):                               # P in {1, 2, 3}
        acc_ref[p] += jnp.dot(x, w_ref[p], preferred_element_type=jnp.float32)

    @pl.when(kk == pl.num_programs(2) - 1)
    def _():
        for p in range(n_proj):
            o_ref[p] = (acc_ref[p] + b_ref[p]).astype(o_ref.dtype)


def fused_linear(x, w_t, bias, *, out_dtype, tm_max=512):
    """x: (M, K); w_t: (P, K, Nf) transposed+LoRA-folded; bias: (P, Nf) f32."""
    P, K, Nf = w_t.shape
    M = x.shape[0]
    x_isz = jnp.dtype(x.dtype).itemsize
    w_isz = jnp.dtype(w_t.dtype).itemsize
    o_isz = jnp.dtype(out_dtype).itemsize
    quant = 16 if x_isz == 2 else (32 if x_isz == 1 else 8)   # sublane quantum
    budget = _vmem_budget()

    # Prefer full-extent K/N: weight block index is then constant across the
    # whole grid and the weights are fetched ~once (big HBM saving on v5e).
    if 2 * P * K * Nf * w_isz <= budget // 2:
        tk, Kp, tn, Np = K, K, Nf, Nf
    else:
        tk, Kp = _pick_dim(K, 512, 128)
        tn, Np = _pick_dim(Nf, 512, 128)

    def est(tm):
        return (2 * tm * tk * x_isz + 2 * P * tk * tn * w_isz + 2 * P * tn * 4
                + 2 * P * tm * tn * o_isz + P * tm * tn * 4)

    tm_cap = tm_max
    while tm_cap > quant and est(tm_cap) > budget:
        tm_cap //= 2
    tm, Mp = _pick_dim(M, tm_cap, quant)

    if Mp != M or Kp != K:
        x = jnp.pad(x, ((0, Mp - M), (0, Kp - K)))
    if Kp != K or Np != Nf:
        w_t = jnp.pad(w_t, ((0, 0), (0, Kp - K), (0, Np - Nf)))
    b = bias.astype(jnp.float32).reshape(P, 1, Nf)
    if Np != Nf:
        b = jnp.pad(b, ((0, 0), (0, 0), (0, Np - Nf)))

    grid = (Mp // tm, Np // tn, Kp // tk)
    out = pl.pallas_call(
        _linear_kernel,
        out_shape=jax.ShapeDtypeStruct((P, Mp, Np), out_dtype),
        grid_spec=pltpu.PrefetchScalarGridSpec(
            num_scalar_prefetch=0,
            grid=grid,
            in_specs=[
                pl.BlockSpec((tm, tk), lambda i, j, kk: (i, kk)),
                pl.BlockSpec((P, tk, tn), lambda i, j, kk: (0, kk, j)),
                pl.BlockSpec((P, 1, tn), lambda i, j, kk: (0, 0, j)),
            ],
            out_specs=pl.BlockSpec((P, tm, tn), lambda i, j, kk: (0, i, j)),
            scratch_shapes=[pltpu.VMEM((P, tm, tn), jnp.float32)],
        ),
        compiler_params=pltpu.CompilerParams(
            dimension_semantics=("parallel", "parallel", "arbitrary"),
            vmem_limit_bytes=int(min(budget, max(2 * est(tm), 32 << 20))),
        ),
        cost_estimate=pl.CostEstimate(
            flops=int(2 * P * M * K * Nf),
            transcendentals=0,
            bytes_accessed=int(M * K * x_isz + P * K * Nf * w_isz
                               + P * Nf * 4 + P * M * Nf * o_isz),
        ),
    )(x, w_t, b)

    if Mp != M or Np != Nf:
        out = out[:, :M, :Nf]
    return out


# ---------------------------------------------------------------------------
# flash attention on batch-major, lane-dense (seq_tile, E) blocks
# ---------------------------------------------------------------------------
def _flash_kernel(num_heads, head_dim, s_valid, use_mask, approx_recip,
                  q_ref, k_ref, v_ref, o_ref, m_ref, l_ref, acc_ref):
    si = pl.program_id(2)
    st = k_ref.shape[2]

    @pl.when(si == 0)
    def _():
        m_ref[...] = jnp.full(m_ref.shape, -jnp.inf, m_ref.dtype)
        l_ref[...] = jnp.zeros(l_ref.shape, l_ref.dtype)
        acc_ref[...] = jnp.zeros(acc_ref.shape, acc_ref.dtype)

    if use_mask:
        col = si * st + lax.broadcasted_iota(jnp.int32, (1, st), 1)
        kv_mask = col < s_valid                              # (1, St)

    # Heads are static lane-slices of the (seq_tile, E) blocks: no per-head
    # DMA, no (H, Dh) layout; 1/sqrt(Dh) is already folded into the q weights.
    for h in range(num_heads):
        d0 = h * head_dim
        q_h = q_ref[0, 0, :, d0:d0 + head_dim]               # (Lt, Dh)
        k_h = k_ref[0, 0, :, d0:d0 + head_dim]               # (St, Dh)
        v_h = v_ref[0, 0, :, d0:d0 + head_dim]               # (St, Dh)

        s = lax.dot_general(q_h, k_h, (((1,), (1,)), ((), ())),
                            preferred_element_type=jnp.float32)   # (Lt, St)
        if use_mask:
            s = jnp.where(kv_mask, s, _NEG_BIG)

        m_prev = m_ref[:, h:h + 1]
        m_new = jnp.maximum(m_prev, jnp.max(s, axis=-1, keepdims=True))
        alpha = jnp.exp(m_prev - m_new)
        p = jnp.exp(s - m_new)
        l_ref[:, h:h + 1] = alpha * l_ref[:, h:h + 1] + \
            jnp.sum(p, axis=-1, keepdims=True)
        acc_ref[:, d0:d0 + head_dim] = alpha * acc_ref[:, d0:d0 + head_dim] + \
            jnp.dot(p.astype(v_h.dtype), v_h, preferred_element_type=jnp.float32)
        m_ref[:, h:h + 1] = m_new

    @pl.when(si == pl.num_programs(2) - 1)
    def _():
        for h in range(num_heads):
            d0 = h * head_dim
            l_h = l_ref[:, h:h + 1]
            inv = pl.reciprocal(l_h, approx=True) if approx_recip else 1.0 / l_h
            acc_ref[:, d0:d0 + head_dim] = acc_ref[:, d0:d0 + head_dim] * inv
        o_ref[0] = acc_ref[...].astype(o_ref.dtype)          # one lane-dense store


def flash_attention(q_arr, k_arr, v_arr, qi, ki, vi, *, num_heads, s_valid,
                    use_mask, lt, st, out_dtype, approx_recip):
    """q_arr: (Pq, N, Lp, E); k_arr/v_arr: (Pk, N, Sp, E); qi/ki/vi select the
    projection in the packed leading axis (so the packed qkv buffer is read
    in place, no slicing through HBM)."""
    _, N, Lp, E = q_arr.shape
    Sp = k_arr.shape[2]
    Dh = E // num_heads
    isz = jnp.dtype(q_arr.dtype).itemsize
    o_isz = jnp.dtype(out_dtype).itemsize
    budget = _vmem_budget()

    est = (2 * lt * E * isz + 4 * st * E * isz + 2 * lt * E * o_isz
           + lt * E * 4 + 2 * lt * num_heads * 4 + 2 * lt * st * 4)

    kernel = partial(_flash_kernel, num_heads, Dh, s_valid, use_mask,
                     approx_recip)
    return pl.pallas_call(
        kernel,
        out_shape=jax.ShapeDtypeStruct((N, Lp, E), out_dtype),
        grid_spec=pltpu.PrefetchScalarGridSpec(
            num_scalar_prefetch=0,
            grid=(N, Lp // lt, Sp // st),
            in_specs=[
                pl.BlockSpec((1, 1, lt, E), lambda n, li, si: (qi, n, li, 0)),
                pl.BlockSpec((1, 1, st, E), lambda n, li, si: (ki, n, si, 0)),
                pl.BlockSpec((1, 1, st, E), lambda n, li, si: (vi, n, si, 0)),
            ],
            out_specs=pl.BlockSpec((1, lt, E), lambda n, li, si: (n, li, 0)),
            scratch_shapes=[
                pltpu.VMEM((lt, num_heads), jnp.float32),   # running max
                pltpu.VMEM((lt, num_heads), jnp.float32),   # running denom
                pltpu.VMEM((lt, E), jnp.float32),           # output accumulator
            ],
        ),
        compiler_params=pltpu.CompilerParams(
            dimension_semantics=("parallel", "parallel", "arbitrary"),
            vmem_limit_bytes=int(min(budget, max(2 * est, 32 << 20))),
        ),
        cost_estimate=pl.CostEstimate(
            flops=int(4 * N * num_heads * Lp * Sp * Dh),
            transcendentals=int(N * num_heads * Lp * Sp),
            bytes_accessed=int((N * Lp * E + 2 * N * Sp * E) * isz
                               + N * Lp * E * o_isz),
        ),
    )(q_arr, k_arr, v_arr)


# ---------------------------------------------------------------------------
# full forward
# ---------------------------------------------------------------------------
def plain_mha_lora_forward(query, key, value, params, num_heads, scaling,
                           compute_dtype=jnp.bfloat16, lt_max=256, st_max=512):
    """params[name] = (W (Eo,Ei), lora_A (r,Ei), lora_B (Eo,r), bias (Eo,)).

    compute_dtype=jnp.bfloat16 is the fast default (bf16 MXU, f32 accumulate);
    pass jnp.float32 for a numerics-parity mode.
    """
    L, N, E = query.shape
    S = key.shape[0]
    assert E % num_heads == 0
    Dh = E // num_heads
    out_dtype = query.dtype
    cd = compute_dtype if compute_dtype is not None else query.dtype
    cd_isz = jnp.dtype(cd).itemsize
    approx_recip = jnp.dtype(cd) != jnp.dtype(jnp.float32)

    budget = _vmem_budget()
    lt_max, st_max = _shrink_attn_caps(E, cd_isz, lt_max, st_max, budget)

    qscale = 1.0 / math.sqrt(Dh)

    def w_eff(name, scale=1.0):
        w, a, b, bias = params[name]
        we = w + scaling * (b @ a)                        # fold LoRA (tiny GEMM)
        return (we.T * scale).astype(cd), bias.astype(jnp.float32) * scale

    wq_t, bq = w_eff("q", qscale)                         # softmax scale folded
    wk_t, bk = w_eff("k")
    wv_t, bv = w_eff("v")
    wo_t, bo = w_eff("o")

    def to_batch_major(x, pad_to):
        xb = jnp.transpose(x, (1, 0, 2)).astype(cd)       # (N, seq, E)
        if pad_to > x.shape[0]:
            xb = jnp.pad(xb, ((0, 0), (0, pad_to - x.shape[0]), (0, 0)))
        return xb

    if (query is key) and (key is value):
        # ---- self-attention fast path: one projection pass for q, k and v ----
        if L <= lt_max:
            lt = st = pp = L                              # full extent, no pad
        else:
            lt = lt_max
            st = max(lt, (min(st_max, _round_up(L, lt)) // lt) * lt)
            pp = _round_up(L, st)
        use_mask = pp > L
        xq = to_batch_major(query, pp)                    # (N, pp, E)
        w3 = jnp.stack([wq_t, wk_t, wv_t])                # weights-only stack
        b3 = jnp.stack([bq, bk, bv])
        qkv = fused_linear(xq.reshape(N * pp, E), w3, b3, out_dtype=cd)
        qkv = qkv.reshape(3, N, pp, E)                    # free reshape
        attn = flash_attention(qkv, qkv, qkv, 0, 1, 2, num_heads=num_heads,
                               s_valid=L, use_mask=use_mask, lt=lt, st=st,
                               out_dtype=cd, approx_recip=approx_recip)
    else:
        lt, lp = _seq_tile(L, lt_max)
        st, sp = _seq_tile(S, st_max)
        use_mask = sp > S
        xq = to_batch_major(query, lp)
        q_arr = fused_linear(xq.reshape(N * lp, E), wq_t[None], bq[None],
                             out_dtype=cd).reshape(1, N, lp, E)
        if key is value:
            xk = to_batch_major(key, sp)
            kv = fused_linear(xk.reshape(N * sp, E),
                              jnp.stack([wk_t, wv_t]), jnp.stack([bk, bv]),
                              out_dtype=cd).reshape(2, N, sp, E)
            k_arr = v_arr = kv
            kidx, vidx = 0, 1
        else:
            xk = to_batch_major(key, sp)
            xv = to_batch_major(value, sp)
            k_arr = fused_linear(xk.reshape(N * sp, E), wk_t[None], bk[None],
                                 out_dtype=cd).reshape(1, N, sp, E)
            v_arr = fused_linear(xv.reshape(N * sp, E), wv_t[None], bv[None],
                                 out_dtype=cd).reshape(1, N, sp, E)
            kidx = vidx = 0
        attn = flash_attention(q_arr, k_arr, v_arr, 0, kidx, vidx,
                               num_heads=num_heads, s_valid=S,
                               use_mask=use_mask, lt=lt, st=st,
                               out_dtype=cd, approx_recip=approx_recip)

    # output projection over the (N, Lp, E) attention result (padded query
    # rows ride along and are dropped by the final slice), then a single
    # transpose back to sequence-first (L, N, E).
    lp_cur = attn.shape[1]
    out = fused_linear(attn.reshape(N * lp_cur, E), wo_t[None], bo[None],
                       out_dtype=out_dtype)[0]
    out = out.reshape(N, lp_cur, E)[:, :L, :]
    return jnp.transpose(out, (1, 0, 2))


# ---------------------------------------------------------------------------
# pure-JAX reference for verification
# ---------------------------------------------------------------------------
def ref_forward(query, key, value, params, num_heads, scaling):
    L, N, E = query.shape
    S = key.shape[0]
    Dh = E // num_heads

    def lin(x, p):
        w, a, b, bias = p
        w_eff = w + scaling * (b @ a)
        return x @ w_eff.T + bias[None, :]

    q = lin(query.reshape(L * N, E), params["q"])
    k = lin(key.reshape(S * N, E), params["k"])
    v = lin(value.reshape(S * N, E), params["v"])
    q = q.reshape(L, N * num_heads, Dh).transpose(1, 0, 2).reshape(N, num_heads, L, Dh)
    k = k.reshape(S, N * num_heads, Dh).transpose(1, 0, 2).reshape(N, num_heads, S, Dh)
    v = v.reshape(S, N * num_heads, Dh).transpose(1, 0, 2).reshape(N, num_heads, S, Dh)
    s = jnp.einsum("nhld,nhsd->nhls", q, k) / math.sqrt(Dh)
    p = jax.nn.softmax(s, axis=-1)
    attn = jnp.einsum("nhls,nhsd->nhld", p, v)
    attn = jnp.transpose(attn, (2, 0, 1, 3)).reshape(L * N, E)
    out = lin(attn, params["o"])
    return out.reshape(L, N, E)


if __name__ == "__main__":
    L, N, E, H, r, lora_alpha = 8, 2, 32, 4, 4, 1
    scaling = lora_alpha / math.sqrt(r)

    key0 = jax.random.PRNGKey(0)
    keys = jax.random.split(key0, 40)
    ki = iter(keys)
    bound = 1.0 / math.sqrt(E)

    def make_proj():
        w = jax.random.uniform(next(ki), (E, E), jnp.float32, -bound, bound)
        bias = jax.random.uniform(next(ki), (E,), jnp.float32, -bound, bound)
        a = jax.random.uniform(next(ki), (r, E), jnp.float32, -bound, bound)
        # module inits lora_B to zeros; use small nonzero values so the LoRA
        # contribution is actually exercised (same math either way).
        b = 0.1 * jax.random.uniform(next(ki), (E, r), jnp.float32, -1.0, 1.0)
        return (w, a, b, bias)

    params = {"q": make_proj(), "k": make_proj(), "v": make_proj(), "o": make_proj()}

    # --- test 1: self-attention fast path, default bf16 compute ---
    x = jax.random.normal(next(ki), (L, N, E), jnp.float32)
    out_bf16 = jax.block_until_ready(
        plain_mha_lora_forward(x, x, x, params, H, scaling))
    ref1 = ref_forward(x, x, x, params, H, scaling)
    assert out_bf16.shape == (L, N, E)
    assert jnp.allclose(out_bf16, ref1, rtol=5e-2, atol=5e-2), "bf16 mismatch"

    # --- test 2: f32 parity mode ---
    out_f32 = jax.block_until_ready(
        plain_mha_lora_forward(x, x, x, params, H, scaling,
                               compute_dtype=jnp.float32))
    assert jnp.allclose(out_f32, ref1, rtol=1e-3, atol=1e-3), "f32 mismatch"

    # --- test 3: cross-attention with padded / masked sequence tiles ---
    Lq, Skv = 20, 24
    q_in = jax.random.normal(next(ki), (Lq, N, E), jnp.float32)
    k_in = jax.random.normal(next(ki), (Skv, N, E), jnp.float32)
    v_in = jax.random.normal(next(ki), (Skv, N, E), jnp.float32)
    out3 = jax.block_until_ready(
        plain_mha_lora_forward(q_in, k_in, v_in, params, H, scaling,
                               lt_max=16, st_max=16))
    ref3 = ref_forward(q_in, k_in, v_in, params, H, scaling)
    assert out3.shape == (Lq, N, E)
    assert jnp.allclose(out3, ref3, rtol=5e-2, atol=5e-2), "padded-path mismatch"

    print("KERNEL_OK")
</pallas_src>

<mosaic_0001>
module attributes {stable_mosaic.version = 11 : i64} {
  func.func @_linear_kernel(%arg0: i32, %arg1: i32, %arg2: i32, %arg3: memref<16x32xbf16, #tpu.memory_space<vmem>>, %arg4: memref<3x32x32xbf16, #tpu.memory_space<vmem>>, %arg5: memref<3x1x32xf32, #tpu.memory_space<vmem>>, %arg6: memref<3x16x32xbf16, #tpu.memory_space<vmem>>, %arg7: memref<3x16x32xf32, #tpu.memory_space<vmem>>) attributes {dimension_semantics = [#tpu.dimension_semantics<parallel>, #tpu.dimension_semantics<parallel>, #tpu.dimension_semantics<arbitrary>], iteration_bounds = array<i64: 1, 1, 1>, scalar_prefetch = 0 : i64, scratch_operands = 1 : i64, tpu.core_type = #tpu.core_type<tc>, window_params = [{transform_indices = @transform_0, window_bounds = array<i64: 16, 32>}, {transform_indices = @transform_1, window_bounds = array<i64: 3, 32, 32>}, {transform_indices = @transform_2, window_bounds = array<i64: 3, 1, 32>}, {transform_indices = @transform_3, window_bounds = array<i64: 3, 16, 32>}]} {
    %c0_i32 = arith.constant 0 : i32
    %0 = arith.cmpi eq, %arg2, %c0_i32 : i32
    %1 = arith.extui %0 : i1 to i32
    %c0_i32_0 = arith.constant 0 : i32
    %2 = arith.cmpi ne, %1, %c0_i32_0 : i32
    scf.if %2 {
      %cst_31 = arith.constant 0.000000e+00 : f32
      %34 = vector.broadcast %cst_31 : f32 to vector<3x16x32xf32>
      %c0_32 = arith.constant 0 : index
      %c0_33 = arith.constant 0 : index
      %c0_34 = arith.constant 0 : index
      %35 = vector.load %arg7[%c0_32, %c0_33, %c0_34] : memref<3x16x32xf32, #tpu.memory_space<vmem>>, vector<3x16x32xf32>
      tpu.vector_store %arg7[%c0_32, %c0_33, %c0_34], %34 {strides = array<i32>} : memref<3x16x32xf32, #tpu.memory_space<vmem>>, vector<3x16x32xf32>,
    } else {
    }
    %c0 = arith.constant 0 : index
    %c0_1 = arith.constant 0 : index
    %3 = vector.load %arg3[%c0, %c0_1] : memref<16x32xbf16, #tpu.memory_space<vmem>>, vector<16x32xbf16>
    %c0_2 = arith.constant 0 : index
    %c0_3 = arith.constant 0 : index
    %c0_4 = arith.constant 0 : index
    %4 = vector.load %arg7[%c0_2, %c0_3, %c0_4] : memref<3x16x32xf32, #tpu.memory_space<vmem>>, vector<1x16x32xf32>
    %5 = vector.shape_cast %4 : vector<1x16x32xf32> to vector<16x32xf32>
    %c0_5 = arith.constant 0 : index
    %c0_6 = arith.constant 0 : index
    %c0_7 = arith.constant 0 : index
    %6 = vector.load %arg4[%c0_5, %c0_6, %c0_7] : memref<3x32x32xbf16, #tpu.memory_space<vmem>>, vector<1x32x32xbf16>
    %7 = vector.shape_cast %6 : vector<1x32x32xbf16> to vector<32x32xbf16>
    %cst = arith.constant dense<0.000000e+00> : vector<16x32xf32>
    %8 = tpu.matmul %3, %7, %cst {dimension_numbers = #tpu.dot_dimension_numbers<[1], [0], [0], [1], [0, 0, 1, 1], [], []>} : vector<16x32xbf16>, vector<32x32xbf16>, vector<16x32xf32> -> vector<16x32xf32>
    %9 = arith.addf %5, %8 : vector<16x32xf32>
    %c0_8 = arith.constant 0 : index
    %c0_9 = arith.constant 0 : index
    %c0_10 = arith.constant 0 : index
    %10 = vector.load %arg7[%c0_8, %c0_9, %c0_10] : memref<3x16x32xf32, #tpu.memory_space<vmem>>, vector<1x16x32xf32>
    %11 = vector.shape_cast %10 : vector<1x16x32xf32> to vector<16x32xf32>
    %12 = vector.shape_cast %9 : vector<16x32xf32> to vector<1x16x32xf32>
    tpu.vector_store %arg7[%c0_8, %c0_9, %c0_10], %12 {strides = array<i32>} : memref<3x16x32xf32, #tpu.memory_space<vmem>>, vector<1x16x32xf32>,
    %c1 = arith.constant 1 : index
    %c0_11 = arith.constant 0 : index
    %c0_12 = arith.constant 0 : index
    %13 = vector.load %arg7[%c1, %c0_11, %c0_12] : memref<3x16x32xf32, #tpu.memory_space<vmem>>, vector<1x16x32xf32>
    %14 = vector.shape_cast %13 : vector<1x16x32xf32> to vector<16x32xf32>
    %c1_13 = arith.constant 1 : index
    %c0_14 = arith.constant 0 : index
    %c0_15 = arith.constant 0 : index
    %15 = vector.load %arg4[%c1_13, %c0_14, %c0_15] : memref<3x32x32xbf16, #tpu.memory_space<vmem>>, vector<1x32x32xbf16>
    %16 = vector.shape_cast %15 : vector<1x32x32xbf16> to vector<32x32xbf16>
    %cst_16 = arith.constant dense<0.000000e+00> : vector<16x32xf32>
    %17 = tpu.matmul %3, %16, %cst_16 {dimension_numbers = #tpu.dot_dimension_numbers<[1], [0], [0], [1], [0, 0, 1, 1], [], []>} : vector<16x32xbf16>, vector<32x32xbf16>, vector<16x32xf32> -> vector<16x32xf32>
    %18 = arith.addf %14, %17 : vector<16x32xf32>
    %c1_17 = arith.constant 1 : index
    %c0_18 = arith.constant 0 : index
    %c0_19 = arith.constant 0 : index
    %19 = vector.load %arg7[%c1_17, %c0_18, %c0_19] : memref<3x16x32xf32, #tpu.memory_space<vmem>>, vector<1x16x32xf32>
    %20 = vector.shape_cast %19 : vector<1x16x32xf32> to vector<16x32xf32>
    %21 = vector.shape_cast %18 : vector<16x32xf32> to vector<1x16x32xf32>
    tpu.vector_store %arg7[%c1_17, %c0_18, %c0_19], %21 {strides = array<i32>} : memref<3x16x32xf32, #tpu.memory_space<vmem>>, vector<1x16x32xf32>,
    %c2 = arith.constant 2 : index
    %c0_20 = arith.constant 0 : index
    %c0_21 = arith.constant 0 : index
    %22 = vector.load %arg7[%c2, %c0_20, %c0_21] : memref<3x16x32xf32, #tpu.memory_space<vmem>>, vector<1x16x32xf32>
    %23 = vector.shape_cast %22 : vector<1x16x32xf32> to vector<16x32xf32>
    %c2_22 = arith.constant 2 : index
    %c0_23 = arith.constant 0 : index
    %c0_24 = arith.constant 0 : index
    %24 = vector.load %arg4[%c2_22, %c0_23, %c0_24] : memref<3x32x32xbf16, #tpu.memory_space<vmem>>, vector<1x32x32xbf16>
    %25 = vector.shape_cast %24 : vector<1x32x32xbf16> to vector<32x32xbf16>
    %cst_25 = arith.constant dense<0.000000e+00> : vector<16x32xf32>
    %26 = tpu.matmul %3, %25, %cst_25 {dimension_numbers = #tpu.dot_dimension_numbers<[1], [0], [0], [1], [0, 0, 1, 1], [], []>} : vector<16x32xbf16>, vector<32x32xbf16>, vector<16x32xf32> -> vector<16x32xf32>
    %27 = arith.addf %23, %26 : vector<16x32xf32>
    %c2_26 = arith.constant 2 : index
    %c0_27 = arith.constant 0 : index
    %c0_28 = arith.constant 0 : index
    %28 = vector.load %arg7[%c2_26, %c0_27, %c0_28] : memref<3x16x32xf32, #tpu.memory_space<vmem>>, vector<1x16x32xf32>
    %29 = vector.shape_cast %28 : vector<1x16x32xf32> to vector<16x32xf32>
    %30 = vector.shape_cast %27 : vector<16x32xf32> to vector<1x16x32xf32>
    tpu.vector_store %arg7[%c2_26, %c0_27, %c0_28], %30 {strides = array<i32>} : memref<3x16x32xf32, #tpu.memory_space<vmem>>, vector<1x16x32xf32>,
    %c0_i32_29 = arith.constant 0 : i32
    %31 = arith.cmpi eq, %arg2, %c0_i32_29 : i32
    %32 = arith.extui %31 : i1 to i32
    %c0_i32_30 = arith.constant 0 : i32
    %33 = arith.cmpi ne, %32, %c0_i32_30 : i32
    scf.if %33 {
      %c0_31 = arith.constant 0 : index
      %c0_32 = arith.constant 0 : index
      %c0_33 = arith.constant 0 : index
      %34 = vector.load %arg7[%c0_31, %c0_32, %c0_33] : memref<3x16x32xf32, #tpu.memory_space<vmem>>, vector<1x16x32xf32>
      %35 = vector.shape_cast %34 : vector<1x16x32xf32> to vector<16x32xf32>
      %c0_34 = arith.constant 0 : index
      %c0_35 = arith.constant 0 : index
      %c0_36 = arith.constant 0 : index
      %36 = vector.load %arg5[%c0_34, %c0_35, %c0_36] : memref<3x1x32xf32, #tpu.memory_space<vmem>>, vector<1x1x32xf32>
      %37 = vector.shape_cast %36 : vector<1x1x32xf32> to vector<1x32xf32>
      %38 = vector.broadcast %37 : vector<1x32xf32> to vector<16x32xf32>
      %39 = arith.addf %35, %38 : vector<16x32xf32>
      %40 = arith.truncf %39 : vector<16x32xf32> to vector<16x32xbf16>
      %c0_37 = arith.constant 0 : index
      %c0_38 = arith.constant 0 : index
      %c0_39 = arith.constant 0 : index
      %41 = vector.load %arg6[%c0_37, %c0_38, %c0_39] : memref<3x16x32xbf16, #tpu.memory_space<vmem>>, vector<1x16x32xbf16>
      %42 = vector.shape_cast %41 : vector<1x16x32xbf16> to vector<16x32xbf16>
      %43 = vector.shape_cast %40 : vector<16x32xbf16> to vector<1x16x32xbf16>
      tpu.vector_store %arg6[%c0_37, %c0_38, %c0_39], %43 {strides = array<i32>} : memref<3x16x32xbf16, #tpu.memory_space<vmem>>, vector<1x16x32xbf16>,
      %c1_40 = arith.constant 1 : index
      %c0_41 = arith.constant 0 : index
      %c0_42 = arith.constant 0 : index
      %44 = vector.load %arg7[%c1_40, %c0_41, %c0_42] : memref<3x16x32xf32, #tpu.memory_space<vmem>>, vector<1x16x32xf32>
      %45 = vector.shape_cast %44 : vector<1x16x32xf32> to vector<16x32xf32>
      %c1_43 = arith.constant 1 : index
      %c0_44 = arith.constant 0 : index
      %c0_45 = arith.constant 0 : index
      %46 = vector.load %arg5[%c1_43, %c0_44, %c0_45] : memref<3x1x32xf32, #tpu.memory_space<vmem>>, vector<1x1x32xf32>
      %47 = vector.shape_cast %46 : vector<1x1x32xf32> to vector<1x32xf32>
      %48 = vector.broadcast %47 : vector<1x32xf32> to vector<16x32xf32>
      %49 = arith.addf %45, %48 : vector<16x32xf32>
      %50 = arith.truncf %49 : vector<16x32xf32> to vector<16x32xbf16>
      %c1_46 = arith.constant 1 : index
      %c0_47 = arith.constant 0 : index
      %c0_48 = arith.constant 0 : index
      %51 = vector.load %arg6[%c1_46, %c0_47, %c0_48] : memref<3x16x32xbf16, #tpu.memory_space<vmem>>, vector<1x16x32xbf16>
      %52 = vector.shape_cast %51 : vector<1x16x32xbf16> to vector<16x32xbf16>
      %53 = vector.shape_cast %50 : vector<16x32xbf16> to vector<1x16x32xbf16>
      tpu.vector_store %arg6[%c1_46, %c0_47, %c0_48], %53 {strides = array<i32>} : memref<3x16x32xbf16, #tpu.memory_space<vmem>>, vector<1x16x32xbf16>,
      %c2_49 = arith.constant 2 : index
      %c0_50 = arith.constant 0 : index
      %c0_51 = arith.constant 0 : index
      %54 = vector.load %arg7[%c2_49, %c0_50, %c0_51] : memref<3x16x32xf32, #tpu.memory_space<vmem>>, vector<1x16x32xf32>
      %55 = vector.shape_cast %54 : vector<1x16x32xf32> to vector<16x32xf32>
      %c2_52 = arith.constant 2 : index
      %c0_53 = arith.constant 0 : index
      %c0_54 = arith.constant 0 : index
      %56 = vector.load %arg5[%c2_52, %c0_53, %c0_54] : memref<3x1x32xf32, #tpu.memory_space<vmem>>, vector<1x1x32xf32>
      %57 = vector.shape_cast %56 : vector<1x1x32xf32> to vector<1x32xf32>
      %58 = vector.broadcast %57 : vector<1x32xf32> to vector<16x32xf32>
      %59 = arith.addf %55, %58 : vector<16x32xf32>
      %60 = arith.truncf %59 : vector<16x32xf32> to vector<16x32xbf16>
      %c2_55 = arith.constant 2 : index
      %c0_56 = arith.constant 0 : index
      %c0_57 = arith.constant 0 : index
      %61 = vector.load %arg6[%c2_55, %c0_56, %c0_57] : memref<3x16x32xbf16, #tpu.memory_space<vmem>>, vector<1x16x32xbf16>
      %62 = vector.shape_cast %61 : vector<1x16x32xbf16> to vector<16x32xbf16>
      %63 = vector.shape_cast %60 : vector<16x32xbf16> to vector<1x16x32xbf16>
      tpu.vector_store %arg6[%c2_55, %c0_56, %c0_57], %63 {strides = array<i32>} : memref<3x16x32xbf16, #tpu.memory_space<vmem>>, vector<1x16x32xbf16>,
    } else {
    }
    return
  }
  func.func @transform_0(%arg0: i32, %arg1: i32, %arg2: i32) -> (i32, i32) {
    %c0_i32 = arith.constant 0 : i32
    return %arg0, %arg2 : i32, i32
  }
  func.func @transform_1(%arg0: i32, %arg1: i32, %arg2: i32) -> (i32, i32, i32) {
    %c0_i32 = arith.constant 0 : i32
    %c0_i32_0 = arith.constant 0 : i32
    return %c0_i32, %arg2, %arg1 : i32, i32, i32
  }
  func.func @transform_2(%arg0: i32, %arg1: i32, %arg2: i32) -> (i32, i32, i32) {
    %c0_i32 = arith.constant 0 : i32
    %c0_i32_0 = arith.constant 0 : i32
    %c0_i32_1 = arith.constant 0 : i32
    return %c0_i32, %c0_i32_0, %arg1 : i32, i32, i32
  }
  func.func @transform_3(%arg0: i32, %arg1: i32, %arg2: i32) -> (i32, i32, i32) {
    %c0_i32 = arith.constant 0 : i32
    %c0_i32_0 = arith.constant 0 : i32
    return %c0_i32, %arg0, %arg1 : i32, i32, i32
  }
}

</mosaic_0001>

<llo_original>
// kernel: tpu_custom_call.1
$region0: #{tpu_custom_call.1}
  #allocation0 [shape = 'u32[]', space=smem, size = 0x4, offset = 0x4, fixed_abs, tag = 'smem constant byte address 0x4 - core index']
  #allocation1 [shape = 'u32[144,128]{1,0:T(1,128)}', space=vmem, size = 0x12000, scoped, tag = 'internal scratch']
  #allocation2 [shape = 'f32[3,16,32]{2,1,0:T(8,128)}', space=vmem, size = 0x6000, scoped, tag = 'scratch operand']
  %s0 = inlined_call_operand.hbm [shape: bf16[16,32], index: 0, kind: input, shape index: {}]
  %s1 = inlined_call_operand.hbm [shape: bf16[3,32,32], index: 1, kind: input, shape index: {}]
  %s2 = inlined_call_operand.vmem [shape: f32[3,1,32], index: 2, kind: input, shape index: {}]
  %s3 = inlined_call_operand.hbm [shape: bf16[3,16,32], index: 3, kind: output, shape index: {}]
  %s4 = sld [smem:[#allocation0]]
  $region38: #{tpu_custom_call.1} parent=0
    _
  %s6 = ssub.s32 1, %s4
  %s7 = scalar_select 0, %s6, %s4
  $region1: #{tpu_custom_call.1} parent=0
    #allocation3 [shape = 'u8[4096]{0}', space=vmem, size = 0x1000, scoped, tag = 'input window, operand 0, single buffered']
    #allocation4 [shape = 's32[1]{0}', space=sflag, size = 0x4, scoped, tag = 'scoped memory for tpu_custom_call.1']
    #allocation5 [shape = 's32[1]{0}', space=sflag, size = 0x4, scoped, tag = 'scoped memory for tpu_custom_call.1']
    #allocation6 [shape = 'u8[24576]{0}', space=vmem, size = 0x6000, scoped, tag = 'input window, operand 1, single buffered']
    #allocation7 [shape = 's32[1]{0}', space=sflag, size = 0x4, scoped, tag = 'scoped memory for tpu_custom_call.1']
    #allocation8 [shape = 'u8[12288]{0}', space=vmem, size = 0x3000, scoped, tag = 'output window, operand 0, single buffered']
    %8 = vsyncpa [#allocation4], 0
    %9 = vsyncpa [#allocation7], 0
    %10 = vsyncpa [#allocation5], 0
    // Predicated region
    $region2: #{tpu_custom_call.1} parent=1 // pred_check
      _
    $region3: #{tpu_custom_call.1} parent=1 // pred_check_branch
      %12 = sbr.rel (0) target = $region5
    $region4: #{tpu_custom_call.1} parent=1 // pred_region
      %s14 = ssub.s32 128, 128
      %15 = vsyncadd [#allocation4], %s14
      %s16 = sshll.u32 [#allocation3], 4
      %s17 = int_to_ptr.vmem [resolvable:$true] %s16
      %22 = dma.hbm_to_vmem [thread:$0]  %s0, 128, %s17, [#allocation4], 64, 64, 4
    $region5: #{tpu_custom_call.1} parent=1 // pred_fallthru
      _
    // Predicated region
    $region6: #{tpu_custom_call.1} parent=1 // pred_check
      _
    $region7: #{tpu_custom_call.1} parent=1 // pred_check_branch
      %24 = sbr.rel (0) target = $region9
    $region8: #{tpu_custom_call.1} parent=1 // pred_region
      %s26 = ssub.s32 768, 768
      %27 = vsyncadd [#allocation7], %s26
      %s28 = sshll.u32 [#allocation6], 4
      %s29 = int_to_ptr.vmem [resolvable:$true] %s28
      %34 = dma.hbm_to_vmem [thread:$0]  %s1, 768, %s29, [#allocation7], 64, 64, 4
    $region9: #{tpu_custom_call.1} parent=1 // pred_fallthru
      _
    // Predicated region
    $region10: #{tpu_custom_call.1} parent=1 // pred_check
      _
    $region11: #{tpu_custom_call.1} parent=1 // pred_check_branch
      %36 = sbr.rel (0) target = $region13
    $region12: #{tpu_custom_call.1} parent=1 // pred_region
      _
    $region13: #{tpu_custom_call.1} parent=1 // pred_fallthru
      _
    // Predicated region
    $region14: #{tpu_custom_call.1} parent=1 // pred_check
      _
    $region15: #{tpu_custom_call.1} parent=1 // pred_check_branch
      %38 = sbr.rel (0) target = $region17
    $region16: #{tpu_custom_call.1} parent=1 // pred_region
      %39 = dma.done [#allocation4], 128
    $region17: #{tpu_custom_call.1} parent=1 // pred_fallthru
      _
    // Predicated region
    $region18: #{tpu_custom_call.1} parent=1 // pred_check
      _
    $region19: #{tpu_custom_call.1} parent=1 // pred_check_branch
      %41 = sbr.rel (0) target = $region21
    $region20: #{tpu_custom_call.1} parent=1 // pred_region
      %42 = dma.done [#allocation7], 768
    $region21: #{tpu_custom_call.1} parent=1 // pred_fallthru
      _
    %p44 = scmp.eq.s32.totalorder 0, 0
    // Predicated region
    $region22: #{tpu_custom_call.1} parent=1 // pred_check
      %p45 = pneg %p44
    $region23: #{tpu_custom_call.1} parent=1 // pred_check_branch
      %47 = sbr.rel (%p45) target = $region25
    $region24: #{tpu_custom_call.1} parent=1 // pred_region
      %vm48 = vcmask 261120
      %49 = vst.msk [vmem:[#allocation2] sm:$0xff] %vm48, 0.0
      %50 = vst.msk [vmem:[#allocation2 + $0x8] sm:$0xff] %vm48, 0.0
      %51 = vst.msk [vmem:[#allocation2 + $0x10] sm:$0xff] %vm48, 0.0
      %52 = vst.msk [vmem:[#allocation2 + $0x18] sm:$0xff] %vm48, 0.0
      %53 = vst.msk [vmem:[#allocation2 + $0x20] sm:$0xff] %vm48, 0.0
      %54 = vst.msk [vmem:[#allocation2 + $0x28] sm:$0xff] %vm48, 0.0
    $region25: #{tpu_custom_call.1} parent=1 // pred_fallthru
      _
    %v55 = vld [vmem:[#allocation3] sm:$0xf]
    %v56 = vld [vmem:[#allocation3 + $0x4] sm:$0xf]
    %v57 = vld [vmem:[#allocation2] sm:$0xff]
    %v58 = vld [vmem:[#allocation2 + $0x8] sm:$0xff]
    %v59 = vld [vmem:[#allocation6] sm:$0xf]
    %v60 = vld [vmem:[#allocation6 + $0x4] sm:$0xf]
    %v61 = vld [vmem:[#allocation6 + $0x8] sm:$0xf]
    %v62 = vld [vmem:[#allocation6 + $0xc] sm:$0xf]
    %v65 = vunpack.c.l.b16 %v55
    %v66 = vunpack.c.l.b16 %v56
    %v67 = vpack.c.b16 %v66, %v65
    %v72 = vunpack.c.l.b16 %v59
    %v73 = vunpack.c.l.b16 %v60
    %v74 = vunpack.c.l.b16 %v61
    %v75 = vunpack.c.l.b16 %v62
    %v76 = vpack.c.b16 %v73, %v72
    %v77 = vpack.c.b16 %v75, %v74
    %vm80 = vcmask 261120
    %v82 = vsel %vm80, %v67, 0
    %84 = vmatprep.subr.bf16.mxu0 0
    %85 = vmatpush1.bf16.msra.mxu0 %v76
    %86 = vmatprep.subr.bf16.mxu0 0
    %87 = vmatpush1.bf16.msra.mxu0 %v77
    %88 = vmatprep.subr.bf16.mxu0 0
    %89 = vmatpush1.bf16.msra.mxu0 0
    %90 = vmatprep.subr.bf16.mxu0 0
    %91 = vmatpush1.bf16.msra.mxu0 0
    %92 = vmatprep.subr.bf16.mxu0 0
    %93 = vmatpush1.bf16.msra.mxu0 0
    %94 = vmatprep.subr.bf16.mxu0 0
    %95 = vmatpush1.bf16.msra.mxu0 0
    %96 = vmatprep.subr.bf16.mxu0 0
    %97 = vmatpush1.bf16.msra.mxu0 0
    %98 = vmatprep.subr.bf16.mxu0 0
    %99 = vmatpush1.bf16.msra.mxu0 0
    %100 = vmatprep.subr.bf16.mxu0 0
    %101 = vmatpush1.bf16.msra.mxu0 0
    %102 = vmatprep.subr.bf16.mxu0 0
    %103 = vmatpush1.bf16.msra.mxu0 0
    %104 = vmatprep.subr.bf16.mxu0 0
    %105 = vmatpush1.bf16.msra.mxu0 0
    %106 = vmatprep.subr.bf16.mxu0 0
    %107 = vmatpush1.bf16.msra.mxu0 0
    %108 = vmatprep.subr.bf16.mxu0 0
    %109 = vmatpush1.bf16.msra.mxu0 0
    %110 = vmatprep.subr.bf16.mxu0 0
    %111 = vmatpush1.bf16.msra.mxu0 0
    %112 = vmatprep.subr.bf16.mxu0 0
    %113 = vmatpush1.bf16.msra.mxu0 0
    %114 = vmatprep.subr.bf16.mxu0 0
    %115 = vmatpush1.bf16.msra.mxu0 0
    %116 = vmatprep.mubr.bf16.mxu0 0
    %117 = vmatmul.mubr.bf16.gmra.mrb[0].mxu0 %v82
    %v118 = vpop.f32.mrb[0].mxu0
    %v119 = vadd.f32 0.0, %v118
    %v120 = vpop.f32.mrb[0].mxu0
    %v121 = vpop.f32.mrb[0].mxu0
    %v122 = vadd.f32 0.0, %v121
    %v123 = vpop.f32.mrb[0].mxu0
    %124 = vdwg.mxu0
    %v125 = vadd.f32 %v57, %v119
    %v126 = vadd.f32 %v58, %v122
    %127 = vst.msk [vmem:[#allocation2] sm:$0xff] %vm80, %v125
    %128 = vst.msk [vmem:[#allocation2 + $0x8] sm:$0xff] %vm80, %v126
    %s129 = scalar_lea.vmem [#allocation2], 16
    %v130 = vld [vmem:[%s129] sm:$0xff]
    %v131 = vld [vmem:[%s129 + $0x8] sm:$0xff]
    %s132 = scalar_lea.vmem [#allocation6], 16
    %v133 = vld [vmem:[%s132] sm:$0xf]
    %v134 = vld [vmem:[%s132 + $0x4] sm:$0xf]
    %v135 = vld [vmem:[%s132 + $0x8] sm:$0xf]
    %v136 = vld [vmem:[%s132 + $0xc] sm:$0xf]
    %v141 = vunpack.c.l.b16 %v133
    %v142 = vunpack.c.l.b16 %v134
    %v143 = vunpack.c.l.b16 %v135
    %v144 = vunpack.c.l.b16 %v136
    %v145 = vpack.c.b16 %v142, %v141
    %v146 = vpack.c.b16 %v144, %v143
    %149 = vmatprep.subr.bf16.mxu0 0
    %150 = vmatpush1.bf16.msra.mxu0 %v145
    %151 = vmatprep.subr.bf16.mxu0 0
    %152 = vmatpush1.bf16.msra.mxu0 %v146
    %153 = vmatprep.subr.bf16.mxu0 0
    %154 = vmatpush1.bf16.msra.mxu0 0
    %155 = vmatprep.subr.bf16.mxu0 0
    %156 = vmatpush1.bf16.msra.mxu0 0
    %157 = vmatprep.subr.bf16.mxu0 0
    %158 = vmatpush1.bf16.msra.mxu0 0
    %159 = vmatprep.subr.bf16.mxu0 0
    %160 = vmatpush1.bf16.msra.mxu0 0
    %161 = vmatprep.subr.bf16.mxu0 0
    %162 = vmatpush1.bf16.msra.mxu0 0
    %163 = vmatprep.subr.bf16.mxu0 0
    %164 = vmatpush1.bf16.msra.mxu0 0
    %165 = vmatprep.subr.bf16.mxu0 0
    %166 = vmatpush1.bf16.msra.mxu0 0
    %167 = vmatprep.subr.bf16.mxu0 0
    %168 = vmatpush1.bf16.msra.mxu0 0
    %169 = vmatprep.subr.bf16.mxu0 0
    %170 = vmatpush1.bf16.msra.mxu0 0
    %171 = vmatprep.subr.bf16.mxu0 0
    %172 = vmatpush1.bf16.msra.mxu0 0
    %173 = vmatprep.subr.bf16.mxu0 0
    %174 = vmatpush1.bf16.msra.mxu0 0
    %175 = vmatprep.subr.bf16.mxu0 0
    %176 = vmatpush1.bf16.msra.mxu0 0
    %177 = vmatprep.subr.bf16.mxu0 0
    %178 = vmatpush1.bf16.msra.mxu0 0
    %179 = vmatprep.subr.bf16.mxu0 0
    %180 = vmatpush1.bf16.msra.mxu0 0
    %181 = vmatprep.mubr.bf16.mxu0 0
    %182 = vmatmul.mubr.bf16.gmra.mrb[0].mxu0 %v82
    %v183 = vpop.f32.mrb[0].mxu0
    %v184 = vadd.f32 0.0, %v183
    %v185 = vpop.f32.mrb[0].mxu0
    %v186 = vpop.f32.mrb[0].mxu0
    %v187 = vadd.f32 0.0, %v186
    %v188 = vpop.f32.mrb[0].mxu0
    %189 = vdwg.mxu0
    %v190 = vadd.f32 %v130, %v184
    %v191 = vadd.f32 %v131, %v187
    %192 = vst.msk [vmem:[%s129] sm:$0xff] %vm80, %v190
    %193 = vst.msk [vmem:[%s129 + $0x8] sm:$0xff] %vm80, %v191
    %s194 = scalar_lea.vmem [#allocation2], 32
    %v195 = vld [vmem:[%s194] sm:$0xff]
    %v196 = vld [vmem:[%s194 + $0x8] sm:$0xff]
    %s197 = scalar_lea.vmem [#allocation6], 32
    %v198 = vld [vmem:[%s197] sm:$0xf]
    %v199 = vld [vmem:[%s197 + $0x4] sm:$0xf]
    %v200 = vld [vmem:[%s197 + $0x8] sm:$0xf]
    %v201 = vld [vmem:[%s197 + $0xc] sm:$0xf]
    %v206 = vunpack.c.l.b16 %v198
    %v207 = vunpack.c.l.b16 %v199
    %v208 = vunpack.c.l.b16 %v200
    %v209 = vunpack.c.l.b16 %v201
    %v210 = vpack.c.b16 %v207, %v206
    %v211 = vpack.c.b16 %v209, %v208
    %214 = vmatprep.subr.bf16.mxu0 0
    %215 = vmatpush1.bf16.msra.mxu0 %v210
    %216 = vmatprep.subr.bf16.mxu0 0
    %217 = vmatpush1.bf16.msra.mxu0 %v211
    %218 = vmatprep.subr.bf16.mxu0 0
    %219 = vmatpush1.bf16.msra.mxu0 0
    %220 = vmatprep.subr.bf16.mxu0 0
    %221 = vmatpush1.bf16.msra.mxu0 0
    %222 = vmatprep.subr.bf16.mxu0 0
    %223 = vmatpush1.bf16.msra.mxu0 0
    %224 = vmatprep.subr.bf16.mxu0 0
    %225 = vmatpush1.bf16.msra.mxu0 0
    %226 = vmatprep.subr.bf16.mxu0 0
    %227 = vmatpush1.bf16.msra.mxu0 0
    %228 = vmatprep.subr.bf16.mxu0 0
    %229 = vmatpush1.bf16.msra.mxu0 0
    %230 = vmatprep.subr.bf16.mxu0 0
    %231 = vmatpush1.bf16.msra.mxu0 0
    %232 = vmatprep.subr.bf16.mxu0 0
    %233 = vmatpush1.bf16.msra.mxu0 0
    %234 = vmatprep.subr.bf16.mxu0 0
    %235 = vmatpush1.bf16.msra.mxu0 0
    %236 = vmatprep.subr.bf16.mxu0 0
    %237 = vmatpush1.bf16.msra.mxu0 0
    %238 = vmatprep.subr.bf16.mxu0 0
    %239 = vmatpush1.bf16.msra.mxu0 0
    %240 = vmatprep.subr.bf16.mxu0 0
    %241 = vmatpush1.bf16.msra.mxu0 0
    %242 = vmatprep.subr.bf16.mxu0 0
    %243 = vmatpush1.bf16.msra.mxu0 0
    %244 = vmatprep.subr.bf16.mxu0 0
    %245 = vmatpush1.bf16.msra.mxu0 0
    %246 = vmatprep.mubr.bf16.mxu0 0
    %247 = vmatmul.mubr.bf16.gmra.mrb[0].mxu0 %v82
    %v248 = vpop.f32.mrb[0].mxu0
    %v249 = vadd.f32 0.0, %v248
    %v250 = vpop.f32.mrb[0].mxu0
    %v251 = vpop.f32.mrb[0].mxu0
    %v252 = vadd.f32 0.0, %v251
    %v253 = vpop.f32.mrb[0].mxu0
    %254 = vdwg.mxu0
    %v255 = vadd.f32 %v195, %v249
    %v256 = vadd.f32 %v196, %v252
    %257 = vst.msk [vmem:[%s194] sm:$0xff] %vm80, %v255
    %258 = vst.msk [vmem:[%s194 + $0x8] sm:$0xff] %vm80, %v256
    // Predicated region
    $region26: #{tpu_custom_call.1} parent=1 // pred_check
      %p259 = pneg %p44
    $region27: #{tpu_custom_call.1} parent=1 // pred_check_branch
      %261 = sbr.rel (%p259) target = $region29
    $region28: #{tpu_custom_call.1} parent=1 // pred_region
      %v262 = vld [vmem:[#allocation2] sm:$0xff]
      %v263 = vld [vmem:[#allocation2 + $0x8] sm:$0xff]
      %v264 = vld [vmem:[%s2] sm:$0x1]
      %v266 = vlaneseq
      %v267 = vshrl.u32 %v266, 7
      %v268 = vsub.s32 0, %v267
      %v269 = vrot.slane %v264, %v268
      %v271 = vadd.f32 %v262, %v269
      %v272 = vadd.f32 %v263, %v269
      %v273 = vpack.c.bf16 %v272, %v271
      %v275 = vunpack.c.l.b16 %v273
      %v276 = vunpack.c.h.b16 %v273
      %v277 = vpack.c.b16 %v275, %v275
      %v278 = vpack.c.b16 %v276, %v276
      %vm281 = vcmask 257024
      %282 = vst.msk [vmem:[#allocation8] sm:$0xf] %vm281, %v277
      %283 = vst.msk [vmem:[#allocation8 + $0x4] sm:$0xf] %vm281, %v278
      %v284 = vld [vmem:[%s129] sm:$0xff]
      %v285 = vld [vmem:[%s129 + $0x8] sm:$0xff]
      %s286 = scalar_lea.vmem %s2, 1
      %v287 = vld [vmem:[%s286] sm:$0x1]
      %v289 = vlaneseq
      %v290 = vshrl.u32 %v289, 7
      %v291 = vsub.s32 0, %v290
      %v292 = vrot.slane %v287, %v291
      %v294 = vadd.f32 %v284, %v292
      %v295 = vadd.f32 %v285, %v292
      %v296 = vpack.c.bf16 %v295, %v294
      %v298 = vunpack.c.l.b16 %v296
      %v299 = vunpack.c.h.b16 %v296
      %v300 = vpack.c.b16 %v298, %v298
      %v301 = vpack.c.b16 %v299, %v299
      %s304 = scalar_lea.vmem [#allocation8], 8
      %305 = vst.msk [vmem:[%s304] sm:$0xf] %vm281, %v300
      %306 = vst.msk [vmem:[%s304 + $0x4] sm:$0xf] %vm281, %v301
      %v307 = vld [vmem:[%s194] sm:$0xff]
      %v308 = vld [vmem:[%s194 + $0x8] sm:$0xff]
      %s309 = scalar_lea.vmem %s2, 2
      %v310 = vld [vmem:[%s309] sm:$0x1]
      %v312 = vlaneseq
      %v313 = vshrl.u32 %v312, 7
      %v314 = vsub.s32 0, %v313
      %v315 = vrot.slane %v310, %v314
      %v317 = vadd.f32 %v307, %v315
      %v318 = vadd.f32 %v308, %v315
      %v319 = vpack.c.bf16 %v318, %v317
      %v321 = vunpack.c.l.b16 %v319
      %v322 = vunpack.c.h.b16 %v319
      %v323 = vpack.c.b16 %v321, %v321
      %v324 = vpack.c.b16 %v322, %v322
      %s327 = scalar_lea.vmem [#allocation8], 16
      %328 = vst.msk [vmem:[%s327] sm:$0xf] %vm281, %v323
      %329 = vst.msk [vmem:[%s327 + $0x4] sm:$0xf] %vm281, %v324
    $region29: #{tpu_custom_call.1} parent=1 // pred_fallthru
      _
    // Predicated region
    $region30: #{tpu_custom_call.1} parent=1 // pred_check
      _
    $region31: #{tpu_custom_call.1} parent=1 // pred_check_branch
      %331 = sbr.rel (0) target = $region33
    $region32: #{tpu_custom_call.1} parent=1 // pred_region
      %s333 = ssub.s32 384, 384
      %334 = vsyncadd [#allocation5], %s333
      %s335 = sshll.u32 [#allocation8], 4
      %s336 = int_to_ptr.vmem [resolvable:$true] %s335
      %341 = dma.vmem_to_hbm [thread:$0]  %s336, 384, %s3, [#allocation5], 64, 64, 4
    $region33: #{tpu_custom_call.1} parent=1 // pred_fallthru
      _
    // Predicated region
    $region34: #{tpu_custom_call.1} parent=1 // pred_check
      _
    $region35: #{tpu_custom_call.1} parent=1 // pred_check_branch
      %343 = sbr.rel (0) target = $region37
    $region36: #{tpu_custom_call.1} parent=1 // pred_region
      %344 = dma.done [#allocation5], 384
    $region37: #{tpu_custom_call.1} parent=1 // pred_fallthru
      _
    %345 = vsyncpa [#allocation4], 1
    %346 = vsyncpa [#allocation7], 1
    %347 = vsyncpa [#allocation5], 1

</llo_original>
